<compile_context>
chip_gen: v7x
topology: tpu7x:2x2x1
jax: 0.10.0
libtpu: 0.0.40
codegen_flags: <defaults>
</compile_context>

<pallas_src>
import functools

import jax
import jax.numpy as jnp
from jax.experimental import pallas as pl
from jax.experimental.pallas import tpu as pltpu

LANE = 128


def _round_up(x, m):
    return ((x + m - 1) // m) * m


def _choose_batch_tile(batch, max_tile):
    """16-aligned batch tile; >=2 grid steps for large batches (v7x megacore)."""
    b = _round_up(batch, 16)
    if b >= 2 * max_tile:
        return max_tile
    if b >= 128:
        # Split into (at least) two tiles so both v7x TensorCores get work.
        return min(max_tile, _round_up((b + 1) // 2, 16))
    return b  # tiny batch: one tile, avoid extra per-step overhead


def policy_mlp_kernel(x_ref, w1_ref, w23_ref, b_ref, o_ref):
    """Fused 3-layer MLP on one batch tile.

    x_ref   : (TB, IN)     bf16  state tile (no feature padding)
    w1_ref  : (IN, F)      bf16  resident layer-1 weight
    w23_ref : (2, F, F)    bf16  resident stacked zero-padded W2, W3
    b_ref   : (3, F)       f32   resident stacked zero-padded biases
    o_ref   : (TB, A)      f32   narrow action output
    """
    x = x_ref[...]
    b = b_ref[...]

    # Layer 1: bf16 on MXU, f32 accumulate; relu in f32 (v5e has no bf16 VPU).
    h = jnp.dot(x, w1_ref[...], preferred_element_type=jnp.float32)
    h = jnp.maximum(h + b[0:1, :], 0.0).astype(jnp.bfloat16)

    # Layer 2.
    h = jnp.dot(h, w23_ref[0], preferred_element_type=jnp.float32)
    h = jnp.maximum(h + b[1:2, :], 0.0).astype(jnp.bfloat16)

    # Layer 3 + tanh (EUP) on the narrow action slice only; narrow store
    # writes 16x fewer HBM bytes than a lane-padded f32 slab.
    h = jnp.dot(h, w23_ref[1], preferred_element_type=jnp.float32)
    a = o_ref.shape[-1]
    o_ref[...] = jnp.tanh(h[:, :a] + b[2:3, :a])


def pack_params(params):
    """Pad + stack raw (w1,b1,w2,b2,w3,b3) into MXU-friendly buffers (once)."""
    w1, b1, w2, b2, w3, b3 = params
    input_size = w1.shape[0]
    h1, h2, action_size = w1.shape[1], w2.shape[1], w3.shape[1]
    feat = _round_up(max(h1, h2, action_size), LANE)

    def pad_to(w, rows, cols):
        return jnp.pad(w, ((0, rows - w.shape[0]), (0, cols - w.shape[1])))

    def pad_b(bvec):
        bvec = bvec.reshape(-1)
        return jnp.pad(bvec, (0, feat - bvec.shape[0]))

    w1_p = pad_to(w1, input_size, feat).astype(jnp.bfloat16)            # (IN, F)
    w23_p = jnp.stack([pad_to(w2, feat, feat),
                       pad_to(w3, feat, feat)]).astype(jnp.bfloat16)    # (2, F, F)
    b_all = jnp.stack([pad_b(b1), pad_b(b2), pad_b(b3)]).astype(jnp.float32)
    return w1_p, w23_p, b_all, action_size


@functools.partial(jax.jit, static_argnames=("action_size", "batch_tile"))
def _forward(state, w1_p, w23_p, b_all, *, action_size, batch_tile=4096):
    input_size = w1_p.shape[0]
    feat = w1_p.shape[1]
    batch = state.shape[0]

    tb = _choose_batch_tile(batch, batch_tile)
    b_pad = _round_up(batch, tb)
    grid = (b_pad // tb,)

    # bf16 cast + row padding only (no feature padding); fuses under jit.
    x = state.astype(jnp.bfloat16)
    if b_pad != batch:
        x = jnp.pad(x, ((0, b_pad - batch), (0, 0)))

    cost = pl.CostEstimate(
        flops=2 * b_pad * feat * (input_size + 2 * feat),
        transcendentals=b_pad * action_size,
        bytes_accessed=(x.size * 2 + w1_p.size * 2 + w23_p.size * 2
                        + b_all.size * 4 + b_pad * action_size * 4),
    )

    out = pl.pallas_call(
        policy_mlp_kernel,
        out_shape=jax.ShapeDtypeStruct((b_pad, action_size), jnp.float32),
        grid_spec=pltpu.PrefetchScalarGridSpec(
            num_scalar_prefetch=0,
            grid=grid,
            in_specs=[
                pl.BlockSpec((tb, input_size), lambda i: (i, 0)),    # state tile
                pl.BlockSpec((input_size, feat), lambda i: (0, 0)),  # resident W1
                pl.BlockSpec((2, feat, feat), lambda i: (0, 0, 0)),  # resident W2/W3
                pl.BlockSpec((3, feat), lambda i: (0, 0)),           # resident biases
            ],
            out_specs=pl.BlockSpec((tb, action_size), lambda i: (i, 0)),
        ),
        compiler_params=pltpu.CompilerParams(
            dimension_semantics=("parallel",),        # megacore sharding on v7x
            vmem_limit_bytes=32 * 1024 * 1024,        # headroom for 4096-row tiles
        ),
        cost_estimate=cost,
    )(x, w1_p, w23_p, b_all)

    return out[:batch]


def policy_network_forward(state, packed, *, batch_tile=4096):
    """Run the fused MLP. `packed` comes from pack_params (done once)."""
    w1_p, w23_p, b_all, action_size = packed
    return _forward(state, w1_p, w23_p, b_all,
                    action_size=action_size, batch_tile=batch_tile)


def init_params(key, input_size, hidden_size_1, hidden_size_2, action_size):
    """nn.Linear-style init (uniform +/- 1/sqrt(fan_in)); weights stored as
    (in_features, out_features) = W^T so the kernel does x @ W directly."""
    def linear(key, fan_in, fan_out):
        kw, kb = jax.random.split(key)
        bound = 1.0 / jnp.sqrt(jnp.float32(fan_in))
        w = jax.random.uniform(kw, (fan_in, fan_out), jnp.float32,
                               minval=-bound, maxval=bound)
        b = jax.random.uniform(kb, (1, fan_out), jnp.float32,
                               minval=-bound, maxval=bound)
        return w, b

    k1, k2, k3 = jax.random.split(key, 3)
    w1, b1 = linear(k1, input_size, hidden_size_1)
    w2, b2 = linear(k2, hidden_size_1, hidden_size_2)
    w3, b3 = linear(k3, hidden_size_2, action_size)
    return (w1, b1, w2, b2, w3, b3)


def reference_forward(state, params):
    """Pure-JAX f32 reference for correctness check."""
    w1, b1, w2, b2, w3, b3 = params
    x = jnp.maximum(state @ w1 + b1, 0.0)
    x = jnp.maximum(x @ w2 + b2, 0.0)
    return jnp.tanh(x @ w3 + b3)


if __name__ == "__main__":
    # Small shapes consistent with PolicyNetwork(hidden_1, hidden_2, input, action)
    batch = 8
    input_size = 16
    hidden_size_1 = 32
    hidden_size_2 = 32
    action_size = 8

    key = jax.random.PRNGKey(0)
    k_params, k_state = jax.random.split(key)

    params = init_params(k_params, input_size, hidden_size_1, hidden_size_2,
                         action_size)
    packed = pack_params(params)  # pad/stack once, not per call
    state = jax.random.normal(k_state, (batch, input_size), jnp.float32)

    out = policy_network_forward(state, packed)
    out = jax.block_until_ready(out)

    ref = reference_forward(state, params)
    assert out.shape == (batch, action_size)
    # bf16 matmul inputs (f32 accumulation) -> looser tolerance than pure f32.
    assert jnp.allclose(out, ref, atol=2e-2, rtol=2e-2), (
        f"max abs err {jnp.max(jnp.abs(out - ref))}")

    print("KERNEL_OK")
</pallas_src>

<mosaic_0001>
module attributes {stable_mosaic.version = 11 : i64} {
  func.func @policy_mlp_kernel(%arg0: i32, %arg1: memref<16x16xbf16, #tpu.memory_space<vmem>>, %arg2: memref<16x128xbf16, #tpu.memory_space<vmem>>, %arg3: memref<2x128x128xbf16, #tpu.memory_space<vmem>>, %arg4: memref<3x128xf32, #tpu.memory_space<vmem>>, %arg5: memref<16x8xf32, #tpu.memory_space<vmem>>) attributes {dimension_semantics = [#tpu.dimension_semantics<parallel>], iteration_bounds = array<i64: 1>, scalar_prefetch = 0 : i64, scratch_operands = 0 : i64, tpu.core_type = #tpu.core_type<tc>, window_params = [{transform_indices = @transform_0, window_bounds = array<i64: 16, 16>}, {pipeline_mode = #tpu.pipeline_mode<synchronous>, transform_indices = @transform_1, window_bounds = array<i64: 16, 128>}, {pipeline_mode = #tpu.pipeline_mode<synchronous>, transform_indices = @transform_2, window_bounds = array<i64: 2, 128, 128>}, {pipeline_mode = #tpu.pipeline_mode<synchronous>, transform_indices = @transform_3, window_bounds = array<i64: 3, 128>}, {transform_indices = @transform_4, window_bounds = array<i64: 16, 8>}]} {
    %c0 = arith.constant 0 : index
    %c0_0 = arith.constant 0 : index
    %0 = vector.load %arg1[%c0, %c0_0] : memref<16x16xbf16, #tpu.memory_space<vmem>>, vector<16x16xbf16>
    %c0_1 = arith.constant 0 : index
    %c0_2 = arith.constant 0 : index
    %1 = vector.load %arg4[%c0_1, %c0_2] : memref<3x128xf32, #tpu.memory_space<vmem>>, vector<3x128xf32>
    %c0_3 = arith.constant 0 : index
    %c0_4 = arith.constant 0 : index
    %2 = vector.load %arg2[%c0_3, %c0_4] : memref<16x128xbf16, #tpu.memory_space<vmem>>, vector<16x128xbf16>
    %cst = arith.constant dense<0.000000e+00> : vector<16x128xf32>
    %3 = tpu.matmul %0, %2, %cst {dimension_numbers = #tpu.dot_dimension_numbers<[1], [0], [0], [1], [0, 0, 1, 1], [], []>} : vector<16x16xbf16>, vector<16x128xbf16>, vector<16x128xf32> -> vector<16x128xf32>
    %4 = vector.extract_strided_slice %1 {offsets = [0, 0], sizes = [1, 128], strides = [1, 1]} : vector<3x128xf32> to vector<1x128xf32>
    %5 = vector.broadcast %4 : vector<1x128xf32> to vector<16x128xf32>
    %6 = arith.addf %3, %5 : vector<16x128xf32>
    %cst_5 = arith.constant 0.000000e+00 : f32
    %7 = vector.broadcast %cst_5 : f32 to vector<16x128xf32>
    %8 = arith.maximumf %6, %7 : vector<16x128xf32>
    %9 = arith.truncf %8 : vector<16x128xf32> to vector<16x128xbf16>
    %c0_6 = arith.constant 0 : index
    %c0_7 = arith.constant 0 : index
    %c0_8 = arith.constant 0 : index
    %10 = vector.load %arg3[%c0_6, %c0_7, %c0_8] : memref<2x128x128xbf16, #tpu.memory_space<vmem>>, vector<1x128x128xbf16>
    %11 = vector.shape_cast %10 : vector<1x128x128xbf16> to vector<128x128xbf16>
    %cst_9 = arith.constant dense<0.000000e+00> : vector<16x128xf32>
    %12 = tpu.matmul %9, %11, %cst_9 {dimension_numbers = #tpu.dot_dimension_numbers<[1], [0], [0], [1], [0, 0, 1, 1], [], []>} : vector<16x128xbf16>, vector<128x128xbf16>, vector<16x128xf32> -> vector<16x128xf32>
    %13 = vector.extract_strided_slice %1 {offsets = [1, 0], sizes = [1, 128], strides = [1, 1]} : vector<3x128xf32> to vector<1x128xf32>
    %14 = vector.broadcast %13 : vector<1x128xf32> to vector<16x128xf32>
    %15 = arith.addf %12, %14 : vector<16x128xf32>
    %cst_10 = arith.constant 0.000000e+00 : f32
    %16 = vector.broadcast %cst_10 : f32 to vector<16x128xf32>
    %17 = arith.maximumf %15, %16 : vector<16x128xf32>
    %18 = arith.truncf %17 : vector<16x128xf32> to vector<16x128xbf16>
    %c1 = arith.constant 1 : index
    %c0_11 = arith.constant 0 : index
    %c0_12 = arith.constant 0 : index
    %19 = vector.load %arg3[%c1, %c0_11, %c0_12] : memref<2x128x128xbf16, #tpu.memory_space<vmem>>, vector<1x128x128xbf16>
    %20 = vector.shape_cast %19 : vector<1x128x128xbf16> to vector<128x128xbf16>
    %cst_13 = arith.constant dense<0.000000e+00> : vector<16x128xf32>
    %21 = tpu.matmul %18, %20, %cst_13 {dimension_numbers = #tpu.dot_dimension_numbers<[1], [0], [0], [1], [0, 0, 1, 1], [], []>} : vector<16x128xbf16>, vector<128x128xbf16>, vector<16x128xf32> -> vector<16x128xf32>
    %22 = vector.extract_strided_slice %21 {offsets = [0, 0], sizes = [16, 8], strides = [1, 1]} : vector<16x128xf32> to vector<16x8xf32>
    %23 = vector.extract_strided_slice %1 {offsets = [2, 0], sizes = [1, 8], strides = [1, 1]} : vector<3x128xf32> to vector<1x8xf32>
    %24 = vector.broadcast %23 : vector<1x8xf32> to vector<16x8xf32>
    %25 = arith.addf %22, %24 : vector<16x8xf32>
    %26 = math.tanh %25 : vector<16x8xf32>
    %c0_14 = arith.constant 0 : index
    %c0_15 = arith.constant 0 : index
    %27 = vector.load %arg5[%c0_14, %c0_15] : memref<16x8xf32, #tpu.memory_space<vmem>>, vector<16x8xf32>
    tpu.vector_store %arg5[%c0_14, %c0_15], %26 {strides = array<i32>} : memref<16x8xf32, #tpu.memory_space<vmem>>, vector<16x8xf32>,
    return
  }
  func.func @transform_0(%arg0: i32) -> (i32, i32) {
    %c0_i32 = arith.constant 0 : i32
    %c0_i32_0 = arith.constant 0 : i32
    return %arg0, %c0_i32 : i32, i32
  }
  func.func @transform_1(%arg0: i32) -> (i32, i32) {
    %c0_i32 = arith.constant 0 : i32
    %c0_i32_0 = arith.constant 0 : i32
    %c0_i32_1 = arith.constant 0 : i32
    return %c0_i32, %c0_i32_0 : i32, i32
  }
  func.func @transform_2(%arg0: i32) -> (i32, i32, i32) {
    %c0_i32 = arith.constant 0 : i32
    %c0_i32_0 = arith.constant 0 : i32
    %c0_i32_1 = arith.constant 0 : i32
    %c0_i32_2 = arith.constant 0 : i32
    return %c0_i32, %c0_i32_0, %c0_i32_1 : i32, i32, i32
  }
  func.func @transform_3(%arg0: i32) -> (i32, i32) {
    %c0_i32 = arith.constant 0 : i32
    %c0_i32_0 = arith.constant 0 : i32
    %c0_i32_1 = arith.constant 0 : i32
    return %c0_i32, %c0_i32_0 : i32, i32
  }
  func.func @transform_4(%arg0: i32) -> (i32, i32) {
    %c0_i32 = arith.constant 0 : i32
    %c0_i32_0 = arith.constant 0 : i32
    return %arg0, %c0_i32 : i32, i32
  }
}

</mosaic_0001>

<llo_original>
// kernel: _forward.1
$region0: #{_forward.1}
  #allocation0 [shape = 'u32[]', space=smem, size = 0x4, offset = 0x4, fixed_abs, tag = 'smem constant byte address 0x4 - core index']
  #allocation1 [shape = 'u32[144,128]{1,0:T(1,128)}', space=vmem, size = 0x12000, scoped, tag = 'internal scratch']
  %s0 = inlined_call_operand.vmem [shape: bf16[16,16], index: 0, kind: input, shape index: {}]
  %s1 = inlined_call_operand.vmem [shape: bf16[16,128], index: 1, kind: input, shape index: {}]
  %s2 = inlined_call_operand.hbm [shape: bf16[2,128,128], index: 2, kind: input, shape index: {}]
  %s3 = inlined_call_operand.vmem [shape: f32[3,128], index: 3, kind: input, shape index: {}]
  %s4 = inlined_call_operand.vmem [shape: f32[16,8], index: 4, kind: output, shape index: {}]
  %s5 = sld [smem:[#allocation0]]
  $region30: #{_forward.1} parent=0
    _
  %s7 = ssub.s32 1, %s5
  %s8 = scalar_select 0, %s7, %s5
  $region1: #{_forward.1} parent=0
    #allocation2 [shape = 'u8[65536]{0}', space=vmem, size = 0x10000, scoped, tag = 'input window, operand 2, single buffered']
    #allocation3 [shape = 's32[1]{0}', space=sflag, size = 0x4, scoped, tag = 'scoped memory for _forward.1']
    %9 = vsyncpa [#allocation3], 0
    // Predicated region
    $region2: #{_forward.1} parent=1 // pred_check
      _
    $region3: #{_forward.1} parent=1 // pred_check_branch
      %11 = sbr.rel (0) target = $region5
    $region4: #{_forward.1} parent=1 // pred_region
      _
    $region5: #{_forward.1} parent=1 // pred_fallthru
      _
    // Predicated region
    $region6: #{_forward.1} parent=1 // pred_check
      _
    $region7: #{_forward.1} parent=1 // pred_check_branch
      %13 = sbr.rel (0) target = $region9
    $region8: #{_forward.1} parent=1 // pred_region
      _
    $region9: #{_forward.1} parent=1 // pred_fallthru
      _
    // Predicated region
    $region10: #{_forward.1} parent=1 // pred_check
      _
    $region11: #{_forward.1} parent=1 // pred_check_branch
      %15 = sbr.rel (0) target = $region13
    $region12: #{_forward.1} parent=1 // pred_region
      %s17 = ssub.s32 2048, 2048
      %18 = vsyncadd [#allocation3], %s17
      %s19 = sshll.u32 [#allocation2], 4
      %s20 = int_to_ptr.vmem [resolvable:$true] %s19
      %25 = dma.hbm_to_vmem [thread:$0]  %s2, 2048, %s20, [#allocation3], 64, 64, 4
    $region13: #{_forward.1} parent=1 // pred_fallthru
      _
    // Predicated region
    $region14: #{_forward.1} parent=1 // pred_check
      _
    $region15: #{_forward.1} parent=1 // pred_check_branch
      %27 = sbr.rel (0) target = $region17
    $region16: #{_forward.1} parent=1 // pred_region
      _
    $region17: #{_forward.1} parent=1 // pred_fallthru
      _
    // Predicated region
    $region18: #{_forward.1} parent=1 // pred_check
      _
    $region19: #{_forward.1} parent=1 // pred_check_branch
      %29 = sbr.rel (0) target = $region21
    $region20: #{_forward.1} parent=1 // pred_region
      %30 = dma.done [#allocation3], 2048
    $region21: #{_forward.1} parent=1 // pred_fallthru
      _
    %v32 = vld [vmem:[%s0] sm:$0xf]
    %v33 = vld [vmem:[%s0 + $0x4] sm:$0xf]
    %v34 = vld [vmem:[%s3] sm:$0x7]
    %v35 = vld [vmem:[%s1] sm:$0xf]
    %v36 = vld [vmem:[%s1 + $0x4] sm:$0xf]
    %v37 = vlaneseq
    %v38 = vshrl.u32 %v37, 7
    %v39 = vsub.s32 0, %v38
    %v40 = vrot.slane %v34, %v39
    %v43 = vunpack.c.l.b16 %v32
    %v44 = vunpack.c.l.b16 %v33
    %v45 = vpack.c.b16 %v44, %v43
    %v48 = vunpack.c.l.b16 %v35
    %v49 = vunpack.c.l.b16 %v36
    %v50 = vpack.c.b16 %v49, %v48
    %vm52 = vcmask 130048
    %v54 = vsel %vm52, %v45, 0
    %56 = vmatprep.subr.bf16.mxu0 0
    %57 = vmatpush1.bf16.msra.mxu0 %v50
    %58 = vmatprep.subr.bf16.mxu0 0
    %59 = vmatpush1.bf16.msra.mxu0 0
    %60 = vmatprep.subr.bf16.mxu0 0
    %61 = vmatpush1.bf16.msra.mxu0 0
    %62 = vmatprep.subr.bf16.mxu0 0
    %63 = vmatpush1.bf16.msra.mxu0 0
    %64 = vmatprep.subr.bf16.mxu0 0
    %65 = vmatpush1.bf16.msra.mxu0 0
    %66 = vmatprep.subr.bf16.mxu0 0
    %67 = vmatpush1.bf16.msra.mxu0 0
    %68 = vmatprep.subr.bf16.mxu0 0
    %69 = vmatpush1.bf16.msra.mxu0 0
    %70 = vmatprep.subr.bf16.mxu0 0
    %71 = vmatpush1.bf16.msra.mxu0 0
    %72 = vmatprep.subr.bf16.mxu0 0
    %73 = vmatpush1.bf16.msra.mxu0 0
    %74 = vmatprep.subr.bf16.mxu0 0
    %75 = vmatpush1.bf16.msra.mxu0 0
    %76 = vmatprep.subr.bf16.mxu0 0
    %77 = vmatpush1.bf16.msra.mxu0 0
    %78 = vmatprep.subr.bf16.mxu0 0
    %79 = vmatpush1.bf16.msra.mxu0 0
    %80 = vmatprep.subr.bf16.mxu0 0
    %81 = vmatpush1.bf16.msra.mxu0 0
    %82 = vmatprep.subr.bf16.mxu0 0
    %83 = vmatpush1.bf16.msra.mxu0 0
    %84 = vmatprep.subr.bf16.mxu0 0
    %85 = vmatpush1.bf16.msra.mxu0 0
    %86 = vmatprep.subr.bf16.mxu0 0
    %87 = vmatpush1.bf16.msra.mxu0 0
    %88 = vmatprep.mubr.bf16.mxu0 0
    %89 = vmatmul.mubr.bf16.gmra.mrb[0].mxu0 %v54
    %v90 = vpop.f32.mrb[0].mxu0
    %v91 = vadd.f32 %v40, %v90
    %v92 = vpop.f32.mrb[0].mxu0
    %v93 = vpop.f32.mrb[0].mxu0
    %v94 = vadd.f32 %v40, %v93
    %v95 = vpop.f32.mrb[0].mxu0
    %96 = vdwg.mxu0
    %v97 = vmax.f32 %v91, 0.0
    %v98 = vmax.f32 %v94, 0.0
    %v99 = vpack.c.bf16 %v98, %v97
    %v100 = vld [vmem:[#allocation2] sm:$0xf]
    %v101 = vld [vmem:[#allocation2 + $0x4] sm:$0xf]
    %v102 = vld [vmem:[#allocation2 + $0x8] sm:$0xf]
    %v103 = vld [vmem:[#allocation2 + $0xc] sm:$0xf]
    %v104 = vld [vmem:[#allocation2 + $0x10] sm:$0xf]
    %v105 = vld [vmem:[#allocation2 + $0x14] sm:$0xf]
    %v106 = vld [vmem:[#allocation2 + $0x18] sm:$0xf]
    %v107 = vld [vmem:[#allocation2 + $0x1c] sm:$0xf]
    %v108 = vld [vmem:[#allocation2 + $0x20] sm:$0xf]
    %v109 = vld [vmem:[#allocation2 + $0x24] sm:$0xf]
    %v110 = vld [vmem:[#allocation2 + $0x28] sm:$0xf]
    %v111 = vld [vmem:[#allocation2 + $0x2c] sm:$0xf]
    %v112 = vld [vmem:[#allocation2 + $0x30] sm:$0xf]
    %v113 = vld [vmem:[#allocation2 + $0x34] sm:$0xf]
    %v114 = vld [vmem:[#allocation2 + $0x38] sm:$0xf]
    %v115 = vld [vmem:[#allocation2 + $0x3c] sm:$0xf]
    %v116 = vlaneseq
    %v117 = vshrl.u32 %v116, 7
    %v118 = vsub.s32 1, %v117
    %v119 = vrot.slane %v34, %v118
    %v136 = vunpack.c.l.b16 %v100
    %v137 = vunpack.c.l.b16 %v101
    %v138 = vunpack.c.l.b16 %v102
    %v139 = vunpack.c.l.b16 %v103
    %v140 = vunpack.c.l.b16 %v104
    %v141 = vunpack.c.l.b16 %v105
    %v142 = vunpack.c.l.b16 %v106
    %v143 = vunpack.c.l.b16 %v107
    %v144 = vunpack.c.l.b16 %v108
    %v145 = vunpack.c.l.b16 %v109
    %v146 = vunpack.c.l.b16 %v110
    %v147 = vunpack.c.l.b16 %v111
    %v148 = vunpack.c.l.b16 %v112
    %v149 = vunpack.c.l.b16 %v113
    %v150 = vunpack.c.l.b16 %v114
    %v151 = vunpack.c.l.b16 %v115
    %v152 = vpack.c.b16 %v137, %v136
    %v153 = vpack.c.b16 %v139, %v138
    %v154 = vpack.c.b16 %v141, %v140
    %v155 = vpack.c.b16 %v143, %v142
    %v156 = vpack.c.b16 %v145, %v144
    %v157 = vpack.c.b16 %v147, %v146
    %v158 = vpack.c.b16 %v149, %v148
    %v159 = vpack.c.b16 %v151, %v150
    %168 = vmatprep.subr.bf16.mxu0 0
    %169 = vmatpush1.bf16.msra.mxu0 %v152
    %170 = vmatprep.subr.bf16.mxu0 0
    %171 = vmatpush1.bf16.msra.mxu0 %v153
    %172 = vmatprep.subr.bf16.mxu0 0
    %173 = vmatpush1.bf16.msra.mxu0 %v154
    %174 = vmatprep.subr.bf16.mxu0 0
    %175 = vmatpush1.bf16.msra.mxu0 %v155
    %176 = vmatprep.subr.bf16.mxu0 0
    %177 = vmatpush1.bf16.msra.mxu0 %v156
    %178 = vmatprep.subr.bf16.mxu0 0
    %179 = vmatpush1.bf16.msra.mxu0 %v157
    %180 = vmatprep.subr.bf16.mxu0 0
    %181 = vmatpush1.bf16.msra.mxu0 %v158
    %182 = vmatprep.subr.bf16.mxu0 0
    %183 = vmatpush1.bf16.msra.mxu0 %v159
    %184 = vmatprep.subr.bf16.mxu0 0
    %185 = vmatpush1.bf16.msra.mxu0 0
    %186 = vmatprep.subr.bf16.mxu0 0
    %187 = vmatpush1.bf16.msra.mxu0 0
    %188 = vmatprep.subr.bf16.mxu0 0
    %189 = vmatpush1.bf16.msra.mxu0 0
    %190 = vmatprep.subr.bf16.mxu0 0
    %191 = vmatpush1.bf16.msra.mxu0 0
    %192 = vmatprep.subr.bf16.mxu0 0
    %193 = vmatpush1.bf16.msra.mxu0 0
    %194 = vmatprep.subr.bf16.mxu0 0
    %195 = vmatpush1.bf16.msra.mxu0 0
    %196 = vmatprep.subr.bf16.mxu0 0
    %197 = vmatpush1.bf16.msra.mxu0 0
    %198 = vmatprep.subr.bf16.mxu0 0
    %199 = vmatpush1.bf16.msra.mxu0 0
    %200 = vmatprep.mubr.bf16.mxu0 0
    %201 = vmatmul.mubr.bf16.gmra.mrb[0].mxu0 %v99
    %v202 = vpop.f32.mrb[0].mxu0
    %v203 = vadd.f32 %v119, %v202
    %v204 = vpop.f32.mrb[0].mxu0
    %v205 = vpop.f32.mrb[0].mxu0
    %v206 = vadd.f32 %v119, %v205
    %v207 = vpop.f32.mrb[0].mxu0
    %208 = vdwg.mxu0
    %v209 = vmax.f32 %v203, 0.0
    %v210 = vmax.f32 %v206, 0.0
    %v211 = vpack.c.bf16 %v210, %v209
    %s212 = scalar_lea.vmem [#allocation2], 64
    %v213 = vld [vmem:[%s212] sm:$0xf]
    %v214 = vld [vmem:[%s212 + $0x4] sm:$0xf]
    %v215 = vld [vmem:[%s212 + $0x8] sm:$0xf]
    %v216 = vld [vmem:[%s212 + $0xc] sm:$0xf]
    %v217 = vld [vmem:[%s212 + $0x10] sm:$0xf]
    %v218 = vld [vmem:[%s212 + $0x14] sm:$0xf]
    %v219 = vld [vmem:[%s212 + $0x18] sm:$0xf]
    %v220 = vld [vmem:[%s212 + $0x1c] sm:$0xf]
    %v221 = vld [vmem:[%s212 + $0x20] sm:$0xf]
    %v222 = vld [vmem:[%s212 + $0x24] sm:$0xf]
    %v223 = vld [vmem:[%s212 + $0x28] sm:$0xf]
    %v224 = vld [vmem:[%s212 + $0x2c] sm:$0xf]
    %v225 = vld [vmem:[%s212 + $0x30] sm:$0xf]
    %v226 = vld [vmem:[%s212 + $0x34] sm:$0xf]
    %v227 = vld [vmem:[%s212 + $0x38] sm:$0xf]
    %v228 = vld [vmem:[%s212 + $0x3c] sm:$0xf]
    %v245 = vunpack.c.l.b16 %v213
    %v246 = vunpack.c.l.b16 %v214
    %v247 = vunpack.c.l.b16 %v215
    %v248 = vunpack.c.l.b16 %v216
    %v249 = vunpack.c.l.b16 %v217
    %v250 = vunpack.c.l.b16 %v218
    %v251 = vunpack.c.l.b16 %v219
    %v252 = vunpack.c.l.b16 %v220
    %v253 = vunpack.c.l.b16 %v221
    %v254 = vunpack.c.l.b16 %v222
    %v255 = vunpack.c.l.b16 %v223
    %v256 = vunpack.c.l.b16 %v224
    %v257 = vunpack.c.l.b16 %v225
    %v258 = vunpack.c.l.b16 %v226
    %v259 = vunpack.c.l.b16 %v227
    %v260 = vunpack.c.l.b16 %v228
    %v261 = vpack.c.b16 %v246, %v245
    %v262 = vpack.c.b16 %v248, %v247
    %v263 = vpack.c.b16 %v250, %v249
    %v264 = vpack.c.b16 %v252, %v251
    %v265 = vpack.c.b16 %v254, %v253
    %v266 = vpack.c.b16 %v256, %v255
    %v267 = vpack.c.b16 %v258, %v257
    %v268 = vpack.c.b16 %v260, %v259
    %277 = vmatprep.subr.bf16.mxu0 0
    %278 = vmatpush1.bf16.msra.mxu0 %v261
    %279 = vmatprep.subr.bf16.mxu0 0
    %280 = vmatpush1.bf16.msra.mxu0 %v262
    %281 = vmatprep.subr.bf16.mxu0 0
    %282 = vmatpush1.bf16.msra.mxu0 %v263
    %283 = vmatprep.subr.bf16.mxu0 0
    %284 = vmatpush1.bf16.msra.mxu0 %v264
    %285 = vmatprep.subr.bf16.mxu0 0
    %286 = vmatpush1.bf16.msra.mxu0 %v265
    %287 = vmatprep.subr.bf16.mxu0 0
    %288 = vmatpush1.bf16.msra.mxu0 %v266
    %289 = vmatprep.subr.bf16.mxu0 0
    %290 = vmatpush1.bf16.msra.mxu0 %v267
    %291 = vmatprep.subr.bf16.mxu0 0
    %292 = vmatpush1.bf16.msra.mxu0 %v268
    %293 = vmatprep.subr.bf16.mxu0 0
    %294 = vmatpush1.bf16.msra.mxu0 0
    %295 = vmatprep.subr.bf16.mxu0 0
    %296 = vmatpush1.bf16.msra.mxu0 0
    %297 = vmatprep.subr.bf16.mxu0 0
    %298 = vmatpush1.bf16.msra.mxu0 0
    %299 = vmatprep.subr.bf16.mxu0 0
    %300 = vmatpush1.bf16.msra.mxu0 0
    %301 = vmatprep.subr.bf16.mxu0 0
    %302 = vmatpush1.bf16.msra.mxu0 0
    %303 = vmatprep.subr.bf16.mxu0 0
    %304 = vmatpush1.bf16.msra.mxu0 0
    %305 = vmatprep.subr.bf16.mxu0 0
    %306 = vmatpush1.bf16.msra.mxu0 0
    %307 = vmatprep.subr.bf16.mxu0 0
    %308 = vmatpush1.bf16.msra.mxu0 0
    %309 = vmatprep.mubr.bf16.mxu0 0
    %310 = vmatmul.mubr.bf16.gmra.mrb[0].mxu0 %v211
    %v311 = vpop.f32.mrb[0].mxu0
    %v312 = vadd.f32 0.0, %v311
    %v313 = vpop.f32.mrb[0].mxu0
    %v314 = vpop.f32.mrb[0].mxu0
    %v315 = vadd.f32 0.0, %v314
    %v316 = vpop.f32.mrb[0].mxu0
    %317 = vdwg.mxu0
    %v318 = vlaneseq
    %v319 = vshrl.u32 %v318, 7
    %v320 = vsub.s32 2, %v319
    %v321 = vrot.slane %v34, %v320
    %v322 = vadd.f32 %v312, %v321
    %v323 = vadd.f32 %v315, %v321
    %v324 = vtanh.pop %v322
    %v325 = vtanh.pop %v323
    %vm326 = vcmask 64512
    %327 = vst.msk [vmem:[%s4] sm:$0xff] %vm326, %v324
    %328 = vst.msk [vmem:[%s4 + $0x8] sm:$0xff] %vm326, %v325
    // Predicated region
    $region22: #{_forward.1} parent=1 // pred_check
      _
    $region23: #{_forward.1} parent=1 // pred_check_branch
      %330 = sbr.rel (0) target = $region25
    $region24: #{_forward.1} parent=1 // pred_region
      _
    $region25: #{_forward.1} parent=1 // pred_fallthru
      _
    // Predicated region
    $region26: #{_forward.1} parent=1 // pred_check
      _
    $region27: #{_forward.1} parent=1 // pred_check_branch
      %332 = sbr.rel (0) target = $region29
    $region28: #{_forward.1} parent=1 // pred_region
      _
    $region29: #{_forward.1} parent=1 // pred_fallthru
      _
    %333 = vsyncpa [#allocation3], 1

</llo_original>
